<compile_context>
chip_gen: v7x
topology: tpu7x:2x2x1
jax: 0.10.0
libtpu: 0.0.40
codegen_flags: <defaults>
</compile_context>

<pallas_src>
import functools

import jax
import jax.numpy as jnp
from jax.experimental import pallas as pl
from jax.experimental.pallas import tpu as pltpu


def _cat_cond_bn_kernel(x_ref, scale_ref, shift_ref, o_ref, *,
                        eps, count, tc, resident_affine):
    """One channel tile.

    x_ref:     (N, tc, HW)      activations (HW need not be a multiple of 128;
                                 Mosaic masks the partial lane group in reductions)
    scale_ref: (N, tc, 1) or (N, C, 1) when resident_affine
               gamma_c * bn_gamma   (per-sample, per-channel)
    shift_ref: same shape as scale_ref
               gamma_c * bn_beta + beta_c
    o_ref:     (N, tc, HW)      output
    """
    xf = x_ref[...].astype(jnp.float32)
    inv_count = jnp.float32(1.0 / count)

    # Two-pass per-channel statistics over (N, HW).  Biased variance, matching
    # F.batch_norm(training=True).
    s1 = jnp.sum(jnp.sum(xf, axis=2, keepdims=True), axis=0, keepdims=True)
    mean = s1 * inv_count                                         # (1, tc, 1)
    centered = xf - mean                                          # (N, tc, HW)
    s2 = jnp.sum(jnp.sum(centered * centered, axis=2, keepdims=True),
                 axis=0, keepdims=True)
    var = s2 * inv_count                                          # (1, tc, 1)
    rstd = jax.lax.rsqrt(var + jnp.float32(eps))                  # (1, tc, 1)

    if resident_affine:
        # scale/shift are resident across the whole grid; slice this tile's
        # channel window (tc is a multiple of 8 whenever this path is taken).
        off = pl.multiple_of(pl.program_id(0) * tc, tc)
        sc = scale_ref[:, pl.ds(off, tc), :]
        sh = shift_ref[:, pl.ds(off, tc), :]
    else:
        sc = scale_ref[...]
        sh = shift_ref[...]

    # out = (x - mean) * (rstd * scale) + shift   (single fused FMA per element)
    a = rstd * sc.astype(jnp.float32)                             # (N, tc, 1)
    o_ref[...] = (centered * a + sh.astype(jnp.float32)).astype(o_ref.dtype)


def _choose_tiling(n, c, hw, itemsize, *, channel_tile=None):
    """Pick the channel tile and the scoped-VMEM limit, generation-aware.

    Returns (tc, vmem_limit_bytes).  tc is None when even the smallest legal
    channel tile cannot fit the pipeline footprint (caller falls back to XLA).
    """
    try:
        vmem_phys = int(pltpu.get_tpu_info().vmem_capacity_bytes)
    except Exception:
        vmem_phys = 64 * 1024 * 1024          # conservative (v7x per-TC)
    try:
        kind = jax.devices()[0].device_kind.lower()
    except Exception:
        kind = ""
    # v7x-like: 2 TensorCores per chip, 64 MiB VMEM per core.
    is_v7x_like = ("v7" in kind) or vmem_phys <= 80 * 1024 * 1024

    if is_v7x_like:
        vmem_limit = min(int(vmem_phys * 0.75), 48 * 1024 * 1024)
    else:
        vmem_limit = min(int(vmem_phys * 0.75), 96 * 1024 * 1024)

    # Real pipeline footprint per x tile: 2x input + 2x output double buffers
    # plus ~2 tiles worth of f32 intermediates (centered / staging).
    mult = 6 if itemsize >= 4 else 8
    tile_budget = min(8 * 1024 * 1024, vmem_limit // (mult + 1))

    # Legal channel tiles: divide C and satisfy the (8,128) block rule.
    candidates = [t for t in range(1, c + 1)
                  if c % t == 0 and (t % 8 == 0 or t == c)]

    if channel_tile is not None:
        assert channel_tile in candidates, "channel_tile must divide C and be %8==0 or ==C"
        return channel_tile, vmem_limit

    fitting = [t for t in candidates if n * t * hw * itemsize <= tile_budget]
    if not fitting:
        # TODO(synk): add a chunked two-pass Pallas path (stats accumulation
        # over HW chunks + apply pass) for very large N*H*W; for now the
        # wrapper falls back to plain XLA so huge activations still run.
        return None, vmem_limit

    if is_v7x_like:
        # Keep >= 2 grid steps so the "parallel" axis can use both TensorCores.
        multi = [t for t in fitting if c // t >= 2]
        if multi:
            return max(multi), vmem_limit
    return max(fitting), vmem_limit


def _batchnorm_affine_xla(x, scale, shift, eps):
    """Pure-XLA fallback (same math) for shapes whose tiles cannot fit VMEM."""
    xf = x.astype(jnp.float32)
    mean = jnp.mean(xf, axis=(0, 2, 3), keepdims=True)
    var = jnp.mean(jnp.square(xf - mean), axis=(0, 2, 3), keepdims=True)
    rstd = jax.lax.rsqrt(var + jnp.float32(eps))
    a = rstd * scale[:, :, :, None]
    out = (xf - mean) * a + shift[:, :, :, None]
    return out.astype(x.dtype)


def cat_cond_batchnorm2d(x, c, gammas_weight, betas_weight,
                         bn_gamma, bn_beta, *, eps=2e-5, channel_tile=None):
    """Forward pass of CatCondBatchNorm2d (training-mode batch norm).

    x: (N, C, H, W) NCHW activations
    c: (N,) int32 category ids
    gammas_weight, betas_weight: (n_cat, C) embedding tables
    bn_gamma, bn_beta: (C,) batch-norm affine buffers (gamma_ / beta_)
    channel_tile: optional explicit channel tile (testing / tuning).
    """
    N, C, H, W = x.shape
    HW = H * W

    # Tiny (N,C)-sized glue in plain JAX: embedding gathers + folding the BN
    # affine into the conditional affine so the kernel does one FMA per element.
    gamma_c = gammas_weight[c].astype(jnp.float32)                      # (N, C)
    beta_c = betas_weight[c].astype(jnp.float32)                        # (N, C)
    w = bn_gamma.astype(jnp.float32)[None, :]                           # (1, C)
    b = bn_beta.astype(jnp.float32)[None, :]                            # (1, C)
    scale = (gamma_c * w)[:, :, None]                                   # (N, C, 1)
    shift = (gamma_c * b + beta_c)[:, :, None]                          # (N, C, 1)

    itemsize = jnp.dtype(x.dtype).itemsize
    tc, vmem_limit = _choose_tiling(N, C, HW, itemsize, channel_tile=channel_tile)

    if tc is None:
        out = _batchnorm_affine_xla(x.reshape(N, C, H, W), scale, shift, eps)
        return out

    # Lane-dense layout: spatial axis last.  No padding: the block's last dim
    # equals the full HW, so Mosaic masks the partial lane group internally.
    x_r = x.reshape(N, C, HW)
    num_blocks = C // tc
    resident_affine = num_blocks > 1      # implies tc % 8 == 0 (aligned pl.ds)

    kernel = functools.partial(
        _cat_cond_bn_kernel, eps=float(eps), count=N * HW, tc=tc,
        resident_affine=resident_affine)

    if resident_affine:
        # Fetch scale/shift once and keep them resident across all grid steps.
        scale_spec = pl.BlockSpec((N, C, 1), lambda i: (0, 0, 0))
        shift_spec = pl.BlockSpec((N, C, 1), lambda i: (0, 0, 0))
    else:
        scale_spec = pl.BlockSpec((N, tc, 1), lambda i: (0, i, 0))
        shift_spec = pl.BlockSpec((N, tc, 1), lambda i: (0, i, 0))

    cost = pl.CostEstimate(
        flops=7 * N * C * HW,
        transcendentals=C,
        bytes_accessed=2 * N * C * HW * itemsize + 4 * N * C * 4,
    )

    out = pl.pallas_call(
        kernel,
        out_shape=jax.ShapeDtypeStruct((N, C, HW), x.dtype),
        grid=(num_blocks,),
        in_specs=[
            pl.BlockSpec((N, tc, HW), lambda i: (0, i, 0)),
            scale_spec,
            shift_spec,
        ],
        out_specs=pl.BlockSpec((N, tc, HW), lambda i: (0, i, 0)),
        compiler_params=pltpu.CompilerParams(
            dimension_semantics=("parallel",),
            vmem_limit_bytes=vmem_limit,
        ),
        cost_estimate=cost,
    )(x_r, scale, shift)

    return out.reshape(N, C, H, W)


def _reference(x, c, gammas_weight, betas_weight, bn_gamma, bn_beta, eps=2e-5):
    """Pure-JAX reference mirroring F.batch_norm (training) + conditional affine."""
    mean = jnp.mean(x, axis=(0, 2, 3), keepdims=True)
    var = jnp.mean((x - mean) ** 2, axis=(0, 2, 3), keepdims=True)
    feat = (x - mean) / jnp.sqrt(var + eps)
    feat = feat * bn_gamma[None, :, None, None] + bn_beta[None, :, None, None]
    g = gammas_weight[c][:, :, None, None]
    b = betas_weight[c][:, :, None, None]
    return g * feat + b


if __name__ == "__main__":
    eps = 2e-5  # module default eps=2e-05
    key = jax.random.PRNGKey(0)

    # ---- Test 1: small shape consistent with the module (single channel tile)
    N, C, H, W = 2, 4, 16, 16
    n_cat = 8
    kx, kc, kg, kb, kw, kbb, key = jax.random.split(key, 7)
    x = jax.random.normal(kx, (N, C, H, W), dtype=jnp.float32)
    c = jax.random.randint(kc, (N,), 0, n_cat, dtype=jnp.int32)
    gammas_weight = 1.0 + 0.1 * jax.random.normal(kg, (n_cat, C), dtype=jnp.float32)
    betas_weight = 0.1 * jax.random.normal(kb, (n_cat, C), dtype=jnp.float32)
    bn_gamma = 1.0 + 0.1 * jax.random.normal(kw, (C,), dtype=jnp.float32)
    bn_beta = 0.1 * jax.random.normal(kbb, (C,), dtype=jnp.float32)

    out = cat_cond_batchnorm2d(x, c, gammas_weight, betas_weight,
                               bn_gamma, bn_beta, eps=eps)
    out = jax.block_until_ready(out)
    ref = _reference(x, c, gammas_weight, betas_weight, bn_gamma, bn_beta, eps=eps)
    assert out.shape == (N, C, H, W)
    assert jnp.allclose(out, ref, atol=1e-4, rtol=1e-4), "test1 mismatch vs reference"

    # ---- Test 2: multi-step channel grid, HW not a multiple of 128 (7x7=49),
    #      exercises masked reductions, masked partial stores and the resident
    #      scale/shift path (channel_tile=8 -> grid of 4 steps).
    N2, C2, H2, W2 = 2, 32, 7, 7
    kx2, kc2, kg2, kb2, kw2, kbb2, key = jax.random.split(key, 7)
    x2 = 0.5 + jax.random.normal(kx2, (N2, C2, H2, W2), dtype=jnp.float32)
    c2 = jax.random.randint(kc2, (N2,), 0, n_cat, dtype=jnp.int32)
    gammas_weight2 = 1.0 + 0.1 * jax.random.normal(kg2, (n_cat, C2), dtype=jnp.float32)
    betas_weight2 = 0.1 * jax.random.normal(kb2, (n_cat, C2), dtype=jnp.float32)
    bn_gamma2 = 1.0 + 0.1 * jax.random.normal(kw2, (C2,), dtype=jnp.float32)
    bn_beta2 = 0.1 * jax.random.normal(kbb2, (C2,), dtype=jnp.float32)

    out2 = cat_cond_batchnorm2d(x2, c2, gammas_weight2, betas_weight2,
                                bn_gamma2, bn_beta2, eps=eps, channel_tile=8)
    out2 = jax.block_until_ready(out2)
    ref2 = _reference(x2, c2, gammas_weight2, betas_weight2,
                      bn_gamma2, bn_beta2, eps=eps)
    assert out2.shape == (N2, C2, H2, W2)
    assert jnp.allclose(out2, ref2, atol=1e-4, rtol=1e-4), "test2 mismatch vs reference"

    print("KERNEL_OK")
</pallas_src>

<mosaic_0001>
module attributes {stable_mosaic.version = 11 : i64} {
  func.func @_cat_cond_bn_kernel(%arg0: i32, %arg1: memref<2x4x256xf32, #tpu.memory_space<vmem>>, %arg2: memref<2x4x1xf32, #tpu.memory_space<vmem>>, %arg3: memref<2x4x1xf32, #tpu.memory_space<vmem>>, %arg4: memref<2x4x256xf32, #tpu.memory_space<vmem>>) attributes {dimension_semantics = [#tpu.dimension_semantics<parallel>], iteration_bounds = array<i64: 1>, scalar_prefetch = 0 : i64, scratch_operands = 0 : i64, tpu.core_type = #tpu.core_type<tc>, window_params = [{transform_indices = @transform_0, window_bounds = array<i64: 2, 4, 256>}, {transform_indices = @transform_1, window_bounds = array<i64: 2, 4, 1>}, {transform_indices = @transform_2, window_bounds = array<i64: 2, 4, 1>}, {transform_indices = @transform_3, window_bounds = array<i64: 2, 4, 256>}]} {
    %c0 = arith.constant 0 : index
    %c0_0 = arith.constant 0 : index
    %c0_1 = arith.constant 0 : index
    %0 = vector.load %arg1[%c0, %c0_0, %c0_1] : memref<2x4x256xf32, #tpu.memory_space<vmem>>, vector<2x4x256xf32>
    %cst = arith.constant dense<0.000000e+00> : vector<2x4xf32>
    %1 = vector.multi_reduction <add>, %0, %cst [2] : vector<2x4x256xf32> to vector<2x4xf32>
    %2 = vector.shape_cast %1 : vector<2x4xf32> to vector<2x4x1xf32>
    %cst_2 = arith.constant dense<0.000000e+00> : vector<4x1xf32>
    %3 = vector.multi_reduction <add>, %2, %cst_2 [0] : vector<2x4x1xf32> to vector<4x1xf32>
    %4 = vector.shape_cast %3 : vector<4x1xf32> to vector<1x4x1xf32>
    %cst_3 = arith.constant 0.001953125 : f32
    %5 = vector.broadcast %cst_3 : f32 to vector<1x4x1xf32>
    %6 = arith.mulf %4, %5 : vector<1x4x1xf32>
    %7 = vector.broadcast %6 : vector<1x4x1xf32> to vector<2x4x256xf32>
    %8 = arith.subf %0, %7 : vector<2x4x256xf32>
    %9 = arith.mulf %8, %8 : vector<2x4x256xf32>
    %cst_4 = arith.constant dense<0.000000e+00> : vector<2x4xf32>
    %10 = vector.multi_reduction <add>, %9, %cst_4 [2] : vector<2x4x256xf32> to vector<2x4xf32>
    %11 = vector.shape_cast %10 : vector<2x4xf32> to vector<2x4x1xf32>
    %cst_5 = arith.constant dense<0.000000e+00> : vector<4x1xf32>
    %12 = vector.multi_reduction <add>, %11, %cst_5 [0] : vector<2x4x1xf32> to vector<4x1xf32>
    %13 = vector.shape_cast %12 : vector<4x1xf32> to vector<1x4x1xf32>
    %cst_6 = arith.constant 0.001953125 : f32
    %14 = vector.broadcast %cst_6 : f32 to vector<1x4x1xf32>
    %15 = arith.mulf %13, %14 : vector<1x4x1xf32>
    %cst_7 = arith.constant 2.000000e-05 : f32
    %16 = vector.broadcast %cst_7 : f32 to vector<1x4x1xf32>
    %17 = arith.addf %15, %16 : vector<1x4x1xf32>
    %18 = math.rsqrt %17 : vector<1x4x1xf32>
    %c0_8 = arith.constant 0 : index
    %c0_9 = arith.constant 0 : index
    %c0_10 = arith.constant 0 : index
    %19 = vector.load %arg2[%c0_8, %c0_9, %c0_10] : memref<2x4x1xf32, #tpu.memory_space<vmem>>, vector<2x4x1xf32>
    %c0_11 = arith.constant 0 : index
    %c0_12 = arith.constant 0 : index
    %c0_13 = arith.constant 0 : index
    %20 = vector.load %arg3[%c0_11, %c0_12, %c0_13] : memref<2x4x1xf32, #tpu.memory_space<vmem>>, vector<2x4x1xf32>
    %21 = vector.broadcast %18 : vector<1x4x1xf32> to vector<2x4x1xf32>
    %22 = arith.mulf %21, %19 : vector<2x4x1xf32>
    %23 = vector.broadcast %22 : vector<2x4x1xf32> to vector<2x4x256xf32>
    %24 = arith.mulf %8, %23 : vector<2x4x256xf32>
    %25 = vector.broadcast %20 : vector<2x4x1xf32> to vector<2x4x256xf32>
    %26 = arith.addf %24, %25 : vector<2x4x256xf32>
    %c0_14 = arith.constant 0 : index
    %c0_15 = arith.constant 0 : index
    %c0_16 = arith.constant 0 : index
    %27 = vector.load %arg4[%c0_14, %c0_15, %c0_16] : memref<2x4x256xf32, #tpu.memory_space<vmem>>, vector<2x4x256xf32>
    tpu.vector_store %arg4[%c0_14, %c0_15, %c0_16], %26 {strides = array<i32>} : memref<2x4x256xf32, #tpu.memory_space<vmem>>, vector<2x4x256xf32>,
    return
  }
  func.func @transform_0(%arg0: i32) -> (i32, i32, i32) {
    %c0_i32 = arith.constant 0 : i32
    %c0_i32_0 = arith.constant 0 : i32
    %c0_i32_1 = arith.constant 0 : i32
    return %c0_i32, %arg0, %c0_i32_0 : i32, i32, i32
  }
  func.func @transform_1(%arg0: i32) -> (i32, i32, i32) {
    %c0_i32 = arith.constant 0 : i32
    %c0_i32_0 = arith.constant 0 : i32
    %c0_i32_1 = arith.constant 0 : i32
    return %c0_i32, %arg0, %c0_i32_0 : i32, i32, i32
  }
  func.func @transform_2(%arg0: i32) -> (i32, i32, i32) {
    %c0_i32 = arith.constant 0 : i32
    %c0_i32_0 = arith.constant 0 : i32
    %c0_i32_1 = arith.constant 0 : i32
    return %c0_i32, %arg0, %c0_i32_0 : i32, i32, i32
  }
  func.func @transform_3(%arg0: i32) -> (i32, i32, i32) {
    %c0_i32 = arith.constant 0 : i32
    %c0_i32_0 = arith.constant 0 : i32
    %c0_i32_1 = arith.constant 0 : i32
    return %c0_i32, %arg0, %c0_i32_0 : i32, i32, i32
  }
}

</mosaic_0001>

<llo_original>
// kernel: tpu_custom_call.1
$region0: #{tpu_custom_call.1}
  #allocation0 [shape = 'u32[]', space=smem, size = 0x4, offset = 0x4, fixed_abs, tag = 'smem constant byte address 0x4 - core index']
  #allocation1 [shape = 'u32[144,128]{1,0:T(1,128)}', space=vmem, size = 0x12000, scoped, tag = 'internal scratch']
  %s0 = inlined_call_operand.vmem [shape: f32[2,4,256], index: 0, kind: input, shape index: {}]
  %s1 = inlined_call_operand.vmem [shape: f32[2,4,1], index: 1, kind: input, shape index: {}]
  %s2 = inlined_call_operand.vmem [shape: f32[2,4,1], index: 2, kind: input, shape index: {}]
  %s3 = inlined_call_operand.hbm [shape: f32[2,4,256], index: 3, kind: output, shape index: {}]
  %s4 = sld [smem:[#allocation0]]
  $region22: #{tpu_custom_call.1} parent=0
    _
  %s6 = ssub.s32 1, %s4
  %s7 = scalar_select 0, %s6, %s4
  $region1: #{tpu_custom_call.1} parent=0
    #allocation2 [shape = 'u8[8192]{0}', space=vmem, size = 0x2000, scoped, tag = 'output window, operand 0, single buffered']
    #allocation3 [shape = 's32[1]{0}', space=sflag, size = 0x4, scoped, tag = 'scoped memory for tpu_custom_call.1']
    %8 = vsyncpa [#allocation3], 0
    // Predicated region
    $region2: #{tpu_custom_call.1} parent=1 // pred_check
      _
    $region3: #{tpu_custom_call.1} parent=1 // pred_check_branch
      %10 = sbr.rel (0) target = $region5
    $region4: #{tpu_custom_call.1} parent=1 // pred_region
      _
    $region5: #{tpu_custom_call.1} parent=1 // pred_fallthru
      _
    // Predicated region
    $region6: #{tpu_custom_call.1} parent=1 // pred_check
      _
    $region7: #{tpu_custom_call.1} parent=1 // pred_check_branch
      %12 = sbr.rel (0) target = $region9
    $region8: #{tpu_custom_call.1} parent=1 // pred_region
      _
    $region9: #{tpu_custom_call.1} parent=1 // pred_fallthru
      _
    // Predicated region
    $region10: #{tpu_custom_call.1} parent=1 // pred_check
      _
    $region11: #{tpu_custom_call.1} parent=1 // pred_check_branch
      %14 = sbr.rel (0) target = $region13
    $region12: #{tpu_custom_call.1} parent=1 // pred_region
      _
    $region13: #{tpu_custom_call.1} parent=1 // pred_fallthru
      _
    %v15 = vld [vmem:[%s0] sm:$0xff]
    %v16 = vld [vmem:[%s0 + $0x8] sm:$0xff]
    %v19 = vcombine.high %v15, %v15
    %v20 = vcombine.high %v16, %v16
    %vm23 = vcmask 1043456
    %v24 = vsel %vm23, %v15, 0.0
    %v25 = vsel %vm23, %v19, 0.0
    %v26 = vadd.f32 %v24, %v25
    %27 = vadd.xlane.f32.xlu0 %v26
    %v28 = vpop.xlane.xlu0 %27
    %v29 = vsel %vm23, %v16, 0.0
    %v30 = vsel %vm23, %v20, 0.0
    %v31 = vadd.f32 %v29, %v30
    %32 = vadd.xlane.f32.xlu0 %v31
    %v33 = vpop.xlane.xlu0 %32
    %v34 = vsel %vm23, %v28, 0.0
    %v35 = vsel %vm23, %v33, 0.0
    %v36 = vadd.f32 %v34, %v35
    %v37 = vmul.f32 %v36, 0.001953125
    %v40 = vunpack.c.l.s4 839922192
    %v41 = vunpack.c.0.s8 %v40
    %v42 = vlaneseq
    %v43 = vshrl.u32 %v42, 7
    %v44 = vsub.s32 %v41, %v43
    %v45 = vrot.slane %v37, %v44
    %v47 = vsub.f32 %v15, %v45
    %v48 = vsub.f32 %v16, %v45
    %v49 = vmul.f32 %v47, %v47
    %v50 = vmul.f32 %v48, %v48
    %v53 = vcombine.high %v49, %v49
    %v54 = vcombine.high %v50, %v50
    %v57 = vsel %vm23, %v49, 0.0
    %v58 = vsel %vm23, %v53, 0.0
    %v59 = vadd.f32 %v57, %v58
    %60 = vadd.xlane.f32.xlu0 %v59
    %v61 = vpop.xlane.xlu0 %60
    %v62 = vsel %vm23, %v50, 0.0
    %v63 = vsel %vm23, %v54, 0.0
    %v64 = vadd.f32 %v62, %v63
    %65 = vadd.xlane.f32.xlu0 %v64
    %v66 = vpop.xlane.xlu0 %65
    %v67 = vsel %vm23, %v61, 0.0
    %v68 = vsel %vm23, %v66, 0.0
    %v69 = vadd.f32 %v67, %v68
    %v70 = vmul.f32 %v69, 0.001953125
    %v71 = vadd.f32 %v70, 2e-05
    %v72 = vrsqrt.pop %v71
    %v73 = vld [vmem:[%s1] sm:$0xf]
    %v74 = vld [vmem:[%s1 + $0x4] sm:$0xf]
    %v75 = vld [vmem:[%s2] sm:$0xf]
    %v76 = vld [vmem:[%s2 + $0x4] sm:$0xf]
    %v77 = vmul.f32 %v72, %v73
    %v78 = vmul.f32 %v72, %v74
    %80 = vset.pattern.permute.xlu0 0
    %81 = vperm.xlu0 %80, %v77
    %v82 = vpop.permute.xlu0 %81
    %84 = vset.pattern.permute.xlu0 0
    %85 = vperm.xlu0 %84, %v78
    %v86 = vpop.permute.xlu0 %85
    %v88 = vunpack.c.l.s4 839922192
    %v89 = vunpack.c.0.s8 %v88
    %v90 = vlaneseq
    %v91 = vshrl.u32 %v90, 7
    %v92 = vsub.s32 %v89, %v91
    %v93 = vrot.slane %v82, %v92
    %v95 = vunpack.c.l.s4 839922192
    %v96 = vunpack.c.0.s8 %v95
    %v97 = vlaneseq
    %v98 = vshrl.u32 %v97, 7
    %v99 = vsub.s32 %v96, %v98
    %v100 = vrot.slane %v86, %v99
    %v103 = vmul.f32 %v47, %v93
    %v104 = vmul.f32 %v48, %v100
    %106 = vset.pattern.permute.xlu0 0
    %107 = vperm.xlu0 %106, %v75
    %v108 = vpop.permute.xlu0 %107
    %110 = vset.pattern.permute.xlu0 0
    %111 = vperm.xlu0 %110, %v76
    %v112 = vpop.permute.xlu0 %111
    %v114 = vunpack.c.l.s4 839922192
    %v115 = vunpack.c.0.s8 %v114
    %v116 = vlaneseq
    %v117 = vshrl.u32 %v116, 7
    %v118 = vsub.s32 %v115, %v117
    %v119 = vrot.slane %v108, %v118
    %v121 = vunpack.c.l.s4 839922192
    %v122 = vunpack.c.0.s8 %v121
    %v123 = vlaneseq
    %v124 = vshrl.u32 %v123, 7
    %v125 = vsub.s32 %v122, %v124
    %v126 = vrot.slane %v112, %v125
    %v129 = vadd.f32 %v103, %v119
    %v130 = vadd.f32 %v104, %v126
    %131 = vst [vmem:[#allocation2] sm:$0xff] %v129
    %132 = vst [vmem:[#allocation2 + $0x8] sm:$0xff] %v130
    // Predicated region
    $region14: #{tpu_custom_call.1} parent=1 // pred_check
      _
    $region15: #{tpu_custom_call.1} parent=1 // pred_check_branch
      %134 = sbr.rel (0) target = $region17
    $region16: #{tpu_custom_call.1} parent=1 // pred_region
      %s136 = ssub.s32 256, 256
      %137 = vsyncadd [#allocation3], %s136
      %s138 = sshll.u32 [#allocation2], 4
      %s139 = int_to_ptr.vmem [resolvable:$true] %s138
      %144 = dma.vmem_to_hbm [thread:$0]  %s139, 256, %s3, [#allocation3], 128, 128, 8
    $region17: #{tpu_custom_call.1} parent=1 // pred_fallthru
      _
    // Predicated region
    $region18: #{tpu_custom_call.1} parent=1 // pred_check
      _
    $region19: #{tpu_custom_call.1} parent=1 // pred_check_branch
      %146 = sbr.rel (0) target = $region21
    $region20: #{tpu_custom_call.1} parent=1 // pred_region
      %147 = dma.done [#allocation3], 256
    $region21: #{tpu_custom_call.1} parent=1 // pred_fallthru
      _
    %148 = vsyncpa [#allocation3], 1

</llo_original>
